<compile_context>
chip_gen: v7x
topology: tpu7x:2x2x1
jax: 0.10.0
libtpu: 0.0.40
codegen_flags: <defaults>
</compile_context>

<pallas_src>
import jax
import jax.numpy as jnp
from jax.experimental import pallas as pl
from jax.experimental.pallas import tpu as pltpu


def _round_up(n, m):
    return ((n + m - 1) // m) * m


def _pad_2d(a, rows, cols):
    if a.shape == (rows, cols):
        return a
    return jnp.zeros((rows, cols), a.dtype).at[: a.shape[0], : a.shape[1]].set(a)


def _mlp_kernel(x_ref, w1_ref, b1_ref, w2_ref, b2_ref, o_ref, acc_ref):
    """One (batch-tile, H-chunk) grid step of fc1 -> ReLU -> fc2."""
    k = pl.program_id(1)

    @pl.when(k == 0)
    def _():
        acc_ref[...] = jnp.zeros_like(acc_ref)

    # fc1 chunk: (TB, In_p) @ (In_p, TH) with f32 accumulation on the MXU.
    h = jnp.dot(x_ref[...], w1_ref[...], preferred_element_type=jnp.float32)
    # Bias + ReLU on the f32 accumulator (v5e has no bf16 VPU; matches fp32 ref).
    h = jnp.maximum(h + b1_ref[...], 0.0)
    # fc2 contribution of this H chunk, accumulated in f32 VMEM scratch.
    acc_ref[...] += jnp.dot(h.astype(w2_ref.dtype), w2_ref[...],
                            preferred_element_type=jnp.float32)

    @pl.when(k == pl.num_programs(1) - 1)
    def _():
        o_ref[...] = (acc_ref[...] + b2_ref[...]).astype(o_ref.dtype)


def prepare_params(w1, b1, w2, b2, compute_dtype=None):
    """Pad (lane-dense, multiples of 128) and optionally cast the static
    parameters ONCE; reuse the result for every forward call.

    w1: (In, H); b1: (H,); w2: (H, Out); b2: (Out,)  (pre-transposed layout).
    compute_dtype: e.g. jnp.bfloat16 for MXU-native matmul inputs; biases and
    the bias/ReLU epilogue stay f32 (f32 accumulation in the kernel).
    """
    In, H = w1.shape
    Out = w2.shape[1]
    In_p, H_p, Out_p = (_round_up(d, 128) for d in (In, H, Out))
    wdt = jnp.dtype(compute_dtype) if compute_dtype is not None else jnp.dtype(w1.dtype)
    return dict(
        w1=_pad_2d(w1.astype(wdt), In_p, H_p),
        b1=_pad_2d(b1.astype(jnp.float32).reshape(1, H), 1, H_p),
        w2=_pad_2d(w2.astype(wdt), H_p, Out_p),
        b2=_pad_2d(b2.astype(jnp.float32).reshape(1, Out), 1, Out_p),
        in_size=In, hidden_size=H, out_size=Out,
        compute_dtype=wdt,
    )


# VMEM footprint target (bytes) for picking the H chunk; fits comfortably
# under v7x's 32 MiB default scoped limit and its 64 MiB physical VMEM.
_VMEM_TARGET = 24 << 20


def _vmem_budget(TB, TH, In_p, H_p, Out_p, x_sz, w_sz):
    wbuf = 1 if TH == H_p else 2          # stationary chunks single-buffered
    return (2 * TB * In_p * x_sz          # x, double-buffered
            + 2 * TB * Out_p * 4          # out, double-buffered (f32)
            + wbuf * In_p * TH * w_sz     # w1 chunk
            + wbuf * TH * 4               # b1 chunk
            + wbuf * TH * Out_p * w_sz    # w2 chunk
            + Out_p * 4                   # b2 (single-buffered)
            + TB * Out_p * 4)             # f32 accumulator scratch


def new_model_forward(x, params, *, batch_tile=256):
    """x: (B, In) -> (B, Out), using params from `prepare_params`."""
    In, H, Out = params["in_size"], params["hidden_size"], params["out_size"]
    w1_p, b1_p, w2_p, b2_p = params["w1"], params["b1"], params["w2"], params["b2"]
    cdt = params["compute_dtype"]
    In_p, H_p = w1_p.shape
    Out_p = w2_p.shape[1]
    B = x.shape[0]

    # ---- batch tiling: big tiles amortize per-step overhead; split into >= 2
    # tiles when the batch allows so v7x's two TensorCores both get work. ----
    n_b = max(-(-B // batch_tile), 2 if B >= 16 else 1)
    TB = _round_up(-(-B // n_b), 8)
    B_p = n_b * TB

    # ---- H chunking so weights + pipeline buffers fit the VMEM target. ----
    x_sz = w_sz = cdt.itemsize
    n128 = H_p // 128
    TH = 128
    for c in range(1, n128 + 1):
        if n128 % c:
            continue
        th = H_p // c
        if _vmem_budget(TB, th, In_p, H_p, Out_p, x_sz, w_sz) <= _VMEM_TARGET:
            TH = th
            break
    n_h = H_p // TH
    w_stationary = (n_h == 1)

    # ---- activation padding / cast only when actually needed. ----
    x_in = x if x.dtype == cdt else x.astype(cdt)
    if (B_p, In_p) != (B, In):
        x_in = jnp.zeros((B_p, In_p), cdt).at[:B, :In].set(x_in)

    # Weights are read once (resident/chunked), x once, out written once.
    cost = pl.CostEstimate(
        flops=2 * B_p * H_p * (In_p + Out_p),
        transcendentals=0,
        bytes_accessed=(x_in.size * x_in.dtype.itemsize
                        + w1_p.size * w1_p.dtype.itemsize
                        + b1_p.size * b1_p.dtype.itemsize
                        + w2_p.size * w2_p.dtype.itemsize
                        + b2_p.size * b2_p.dtype.itemsize
                        + B_p * Out_p * 4),
    )

    budget = _vmem_budget(TB, TH, In_p, H_p, Out_p, x_sz, w_sz)
    vmem_limit = min(max(int(budget * 1.5) + (2 << 20), 16 << 20), 48 << 20)

    def _call(use_single_buffer):
        def spec(shape, index_map, stationary):
            if stationary and use_single_buffer:
                return pl.BlockSpec(shape, index_map,
                                    pipeline_mode=pl.Buffered(1))
            return pl.BlockSpec(shape, index_map)

        out = pl.pallas_call(
            _mlp_kernel,
            out_shape=jax.ShapeDtypeStruct((B_p, Out_p), jnp.float32),
            grid=(B_p // TB, n_h),
            in_specs=[
                pl.BlockSpec((TB, In_p), lambda i, k: (i, 0)),        # x (batch-tiled)
                spec((In_p, TH), lambda i, k: (0, k), w_stationary),  # w1 chunk
                spec((1, TH), lambda i, k: (0, k), w_stationary),     # b1 chunk
                spec((TH, Out_p), lambda i, k: (k, 0), w_stationary), # w2 chunk
                spec((1, Out_p), lambda i, k: (0, 0), True),          # b2 (stationary)
            ],
            out_specs=pl.BlockSpec((TB, Out_p), lambda i, k: (i, 0)),
            scratch_shapes=[pltpu.VMEM((TB, Out_p), jnp.float32)],
            compiler_params=pltpu.CompilerParams(
                dimension_semantics=("parallel", "arbitrary"),
                vmem_limit_bytes=vmem_limit),
            cost_estimate=cost,
        )(x_in, w1_p, b1_p, w2_p, b2_p)
        return jax.block_until_ready(out)

    try:
        out_p = _call(True)
    except Exception:
        # Fallback for JAX builds where pipeline_mode=pl.Buffered is not
        # accepted by the top-level pallas_call pipeliner.
        out_p = _call(False)

    if (B_p, Out_p) != (B, Out):
        out_p = out_p[:B, :Out]
    return out_p


def init_params(key, input_size, hidden_size, output_size, dtype=jnp.float32):
    """Deterministic init mimicking nn.Linear's uniform(-1/sqrt(fan_in), 1/sqrt(fan_in))."""
    k1, k2, k3, k4 = jax.random.split(key, 4)
    bound1 = 1.0 / (input_size ** 0.5)
    bound2 = 1.0 / (hidden_size ** 0.5)
    # Stored pre-transposed: (in_features, out_features).
    w1 = jax.random.uniform(k1, (input_size, hidden_size), dtype, -bound1, bound1)
    b1 = jax.random.uniform(k2, (hidden_size,), dtype, -bound1, bound1)
    w2 = jax.random.uniform(k3, (hidden_size, output_size), dtype, -bound2, bound2)
    b2 = jax.random.uniform(k4, (output_size,), dtype, -bound2, bound2)
    return w1, b1, w2, b2


if __name__ == "__main__":
    # Small shapes consistent with the module spec.
    input_size, hidden_size, output_size = 32, 64, 16
    batch = 8

    key = jax.random.PRNGKey(0)
    kx, kp = jax.random.split(key)
    x = jax.random.normal(kx, (batch, input_size), jnp.float32)
    w1, b1, w2, b2 = init_params(kp, input_size, hidden_size, output_size)

    # Pure-JAX reference (same math as PyTorch fc1 -> relu -> fc2).
    ref = jnp.maximum(x @ w1 + b1, 0.0) @ w2 + b2

    # f32 path: weights padded ONCE, reused for every forward call.
    params_f32 = prepare_params(w1, b1, w2, b2)
    out = jax.block_until_ready(new_model_forward(x, params_f32))
    assert out.shape == (batch, output_size)
    assert jnp.allclose(out, ref, atol=1e-5, rtol=1e-5)

    # bf16 matmul-input / f32-accumulation path (MXU-native on v5e/v6e/v7x);
    # slightly looser tolerance vs. the fp32 reference by construction.
    params_bf16 = prepare_params(w1, b1, w2, b2, compute_dtype=jnp.bfloat16)
    out_bf16 = jax.block_until_ready(new_model_forward(x, params_bf16))
    assert out_bf16.shape == (batch, output_size)
    assert jnp.allclose(out_bf16, ref, atol=5e-2, rtol=5e-2)

    print("KERNEL_OK")
</pallas_src>

<mosaic_0001>
module attributes {stable_mosaic.version = 11 : i64} {
  func.func @_mlp_kernel(%arg0: i32, %arg1: i32, %arg2: memref<8x128xf32, #tpu.memory_space<vmem>>, %arg3: memref<128x128xf32, #tpu.memory_space<vmem>>, %arg4: memref<1x128xf32, #tpu.memory_space<vmem>>, %arg5: memref<128x128xf32, #tpu.memory_space<vmem>>, %arg6: memref<1x128xf32, #tpu.memory_space<vmem>>, %arg7: memref<8x128xf32, #tpu.memory_space<vmem>>, %arg8: memref<8x128xf32, #tpu.memory_space<vmem>>) attributes {dimension_semantics = [#tpu.dimension_semantics<parallel>, #tpu.dimension_semantics<arbitrary>], iteration_bounds = array<i64: 1, 1>, scalar_prefetch = 0 : i64, scratch_operands = 1 : i64, tpu.core_type = #tpu.core_type<tc>, window_params = [{transform_indices = @transform_0, window_bounds = array<i64: 8, 128>}, {pipeline_mode = #tpu.pipeline_mode<synchronous>, transform_indices = @transform_1, window_bounds = array<i64: 128, 128>}, {pipeline_mode = #tpu.pipeline_mode<synchronous>, transform_indices = @transform_2, window_bounds = array<i64: 1, 128>}, {pipeline_mode = #tpu.pipeline_mode<synchronous>, transform_indices = @transform_3, window_bounds = array<i64: 128, 128>}, {pipeline_mode = #tpu.pipeline_mode<synchronous>, transform_indices = @transform_4, window_bounds = array<i64: 1, 128>}, {transform_indices = @transform_5, window_bounds = array<i64: 8, 128>}]} {
    %c0_i32 = arith.constant 0 : i32
    %0 = arith.cmpi eq, %arg1, %c0_i32 : i32
    %1 = arith.extui %0 : i1 to i32
    %c0_i32_0 = arith.constant 0 : i32
    %2 = arith.cmpi ne, %1, %c0_i32_0 : i32
    scf.if %2 {
      %cst_16 = arith.constant 0.000000e+00 : f32
      %19 = vector.broadcast %cst_16 : f32 to vector<8x128xf32>
      %c0_17 = arith.constant 0 : index
      %c0_18 = arith.constant 0 : index
      %20 = vector.load %arg8[%c0_17, %c0_18] : memref<8x128xf32, #tpu.memory_space<vmem>>, vector<8x128xf32>
      tpu.vector_store %arg8[%c0_17, %c0_18], %19 {strides = array<i32>} : memref<8x128xf32, #tpu.memory_space<vmem>>, vector<8x128xf32>,
    } else {
    }
    %c0 = arith.constant 0 : index
    %c0_1 = arith.constant 0 : index
    %3 = vector.load %arg2[%c0, %c0_1] : memref<8x128xf32, #tpu.memory_space<vmem>>, vector<8x128xf32>
    %c0_2 = arith.constant 0 : index
    %c0_3 = arith.constant 0 : index
    %4 = vector.load %arg3[%c0_2, %c0_3] : memref<128x128xf32, #tpu.memory_space<vmem>>, vector<128x128xf32>
    %cst = arith.constant dense<0.000000e+00> : vector<8x128xf32>
    %5 = tpu.matmul %3, %4, %cst {dimension_numbers = #tpu.dot_dimension_numbers<[1], [0], [0], [1], [0, 0, 1, 1], [], []>} : vector<8x128xf32>, vector<128x128xf32>, vector<8x128xf32> -> vector<8x128xf32>
    %c0_4 = arith.constant 0 : index
    %c0_5 = arith.constant 0 : index
    %6 = vector.load %arg4[%c0_4, %c0_5] : memref<1x128xf32, #tpu.memory_space<vmem>>, vector<1x128xf32>
    %7 = vector.broadcast %6 : vector<1x128xf32> to vector<8x128xf32>
    %8 = arith.addf %5, %7 : vector<8x128xf32>
    %cst_6 = arith.constant 0.000000e+00 : f32
    %9 = vector.broadcast %cst_6 : f32 to vector<8x128xf32>
    %10 = arith.maximumf %8, %9 : vector<8x128xf32>
    %c0_7 = arith.constant 0 : index
    %c0_8 = arith.constant 0 : index
    %11 = vector.load %arg8[%c0_7, %c0_8] : memref<8x128xf32, #tpu.memory_space<vmem>>, vector<8x128xf32>
    %c0_9 = arith.constant 0 : index
    %c0_10 = arith.constant 0 : index
    %12 = vector.load %arg5[%c0_9, %c0_10] : memref<128x128xf32, #tpu.memory_space<vmem>>, vector<128x128xf32>
    %cst_11 = arith.constant dense<0.000000e+00> : vector<8x128xf32>
    %13 = tpu.matmul %10, %12, %cst_11 {dimension_numbers = #tpu.dot_dimension_numbers<[1], [0], [0], [1], [0, 0, 1, 1], [], []>} : vector<8x128xf32>, vector<128x128xf32>, vector<8x128xf32> -> vector<8x128xf32>
    %14 = arith.addf %11, %13 : vector<8x128xf32>
    %c0_12 = arith.constant 0 : index
    %c0_13 = arith.constant 0 : index
    %15 = vector.load %arg8[%c0_12, %c0_13] : memref<8x128xf32, #tpu.memory_space<vmem>>, vector<8x128xf32>
    tpu.vector_store %arg8[%c0_12, %c0_13], %14 {strides = array<i32>} : memref<8x128xf32, #tpu.memory_space<vmem>>, vector<8x128xf32>,
    %c0_i32_14 = arith.constant 0 : i32
    %16 = arith.cmpi eq, %arg1, %c0_i32_14 : i32
    %17 = arith.extui %16 : i1 to i32
    %c0_i32_15 = arith.constant 0 : i32
    %18 = arith.cmpi ne, %17, %c0_i32_15 : i32
    scf.if %18 {
      %c0_16 = arith.constant 0 : index
      %c0_17 = arith.constant 0 : index
      %19 = vector.load %arg8[%c0_16, %c0_17] : memref<8x128xf32, #tpu.memory_space<vmem>>, vector<8x128xf32>
      %c0_18 = arith.constant 0 : index
      %c0_19 = arith.constant 0 : index
      %20 = vector.load %arg6[%c0_18, %c0_19] : memref<1x128xf32, #tpu.memory_space<vmem>>, vector<1x128xf32>
      %21 = vector.broadcast %20 : vector<1x128xf32> to vector<8x128xf32>
      %22 = arith.addf %19, %21 : vector<8x128xf32>
      %c0_20 = arith.constant 0 : index
      %c0_21 = arith.constant 0 : index
      %23 = vector.load %arg7[%c0_20, %c0_21] : memref<8x128xf32, #tpu.memory_space<vmem>>, vector<8x128xf32>
      tpu.vector_store %arg7[%c0_20, %c0_21], %22 {strides = array<i32>} : memref<8x128xf32, #tpu.memory_space<vmem>>, vector<8x128xf32>,
    } else {
    }
    return
  }
  func.func @transform_0(%arg0: i32, %arg1: i32) -> (i32, i32) {
    %c0_i32 = arith.constant 0 : i32
    %c0_i32_0 = arith.constant 0 : i32
    return %arg0, %c0_i32 : i32, i32
  }
  func.func @transform_1(%arg0: i32, %arg1: i32) -> (i32, i32) {
    %c0_i32 = arith.constant 0 : i32
    %c0_i32_0 = arith.constant 0 : i32
    return %c0_i32, %arg1 : i32, i32
  }
  func.func @transform_2(%arg0: i32, %arg1: i32) -> (i32, i32) {
    %c0_i32 = arith.constant 0 : i32
    %c0_i32_0 = arith.constant 0 : i32
    return %c0_i32, %arg1 : i32, i32
  }
  func.func @transform_3(%arg0: i32, %arg1: i32) -> (i32, i32) {
    %c0_i32 = arith.constant 0 : i32
    %c0_i32_0 = arith.constant 0 : i32
    return %arg1, %c0_i32 : i32, i32
  }
  func.func @transform_4(%arg0: i32, %arg1: i32) -> (i32, i32) {
    %c0_i32 = arith.constant 0 : i32
    %c0_i32_0 = arith.constant 0 : i32
    %c0_i32_1 = arith.constant 0 : i32
    return %c0_i32, %c0_i32_0 : i32, i32
  }
  func.func @transform_5(%arg0: i32, %arg1: i32) -> (i32, i32) {
    %c0_i32 = arith.constant 0 : i32
    %c0_i32_0 = arith.constant 0 : i32
    return %arg0, %c0_i32 : i32, i32
  }
}

module attributes {stable_mosaic.version = 11 : i64} {
  func.func @_mlp_kernel(%arg0: i32, %arg1: i32, %arg2: memref<8x128xf32, #tpu.memory_space<vmem>>, %arg3: memref<128x128xf32, #tpu.memory_space<vmem>>, %arg4: memref<1x128xf32, #tpu.memory_space<vmem>>, %arg5: memref<128x128xf32, #tpu.memory_space<vmem>>, %arg6: memref<1x128xf32, #tpu.memory_space<vmem>>, %arg7: memref<8x128xf32, #tpu.memory_space<vmem>>, %arg8: memref<8x128xf32, #tpu.memory_space<vmem>>) attributes {dimension_semantics = [#tpu.dimension_semantics<parallel>, #tpu.dimension_semantics<arbitrary>], iteration_bounds = array<i64: 1, 1>, scalar_prefetch = 0 : i64, scratch_operands = 1 : i64, tpu.core_type = #tpu.core_type<tc>, window_params = [{transform_indices = @transform_0, window_bounds = array<i64: 8, 128>}, {transform_indices = @transform_1, window_bounds = array<i64: 128, 128>}, {transform_indices = @transform_2, window_bounds = array<i64: 1, 128>}, {transform_indices = @transform_3, window_bounds = array<i64: 128, 128>}, {pipeline_mode = #tpu.pipeline_mode<synchronous>, transform_indices = @transform_4, window_bounds = array<i64: 1, 128>}, {transform_indices = @transform_5, window_bounds = array<i64: 8, 128>}]} {
    %c0_i32 = arith.constant 0 : i32
    %0 = arith.cmpi eq, %arg1, %c0_i32 : i32
    %1 = arith.extui %0 : i1 to i32
    %c0_i32_0 = arith.constant 0 : i32
    %2 = arith.cmpi ne, %1, %c0_i32_0 : i32
    scf.if %2 {
      %cst_16 = arith.constant 0.000000e+00 : f32
      %19 = vector.broadcast %cst_16 : f32 to vector<8x128xf32>
      %c0_17 = arith.constant 0 : index
      %c0_18 = arith.constant 0 : index
      %20 = vector.load %arg8[%c0_17, %c0_18] : memref<8x128xf32, #tpu.memory_space<vmem>>, vector<8x128xf32>
      tpu.vector_store %arg8[%c0_17, %c0_18], %19 {strides = array<i32>} : memref<8x128xf32, #tpu.memory_space<vmem>>, vector<8x128xf32>,
    } else {
    }
    %c0 = arith.constant 0 : index
    %c0_1 = arith.constant 0 : index
    %3 = vector.load %arg2[%c0, %c0_1] : memref<8x128xf32, #tpu.memory_space<vmem>>, vector<8x128xf32>
    %c0_2 = arith.constant 0 : index
    %c0_3 = arith.constant 0 : index
    %4 = vector.load %arg3[%c0_2, %c0_3] : memref<128x128xf32, #tpu.memory_space<vmem>>, vector<128x128xf32>
    %cst = arith.constant dense<0.000000e+00> : vector<8x128xf32>
    %5 = tpu.matmul %3, %4, %cst {dimension_numbers = #tpu.dot_dimension_numbers<[1], [0], [0], [1], [0, 0, 1, 1], [], []>} : vector<8x128xf32>, vector<128x128xf32>, vector<8x128xf32> -> vector<8x128xf32>
    %c0_4 = arith.constant 0 : index
    %c0_5 = arith.constant 0 : index
    %6 = vector.load %arg4[%c0_4, %c0_5] : memref<1x128xf32, #tpu.memory_space<vmem>>, vector<1x128xf32>
    %7 = vector.broadcast %6 : vector<1x128xf32> to vector<8x128xf32>
    %8 = arith.addf %5, %7 : vector<8x128xf32>
    %cst_6 = arith.constant 0.000000e+00 : f32
    %9 = vector.broadcast %cst_6 : f32 to vector<8x128xf32>
    %10 = arith.maximumf %8, %9 : vector<8x128xf32>
    %c0_7 = arith.constant 0 : index
    %c0_8 = arith.constant 0 : index
    %11 = vector.load %arg8[%c0_7, %c0_8] : memref<8x128xf32, #tpu.memory_space<vmem>>, vector<8x128xf32>
    %c0_9 = arith.constant 0 : index
    %c0_10 = arith.constant 0 : index
    %12 = vector.load %arg5[%c0_9, %c0_10] : memref<128x128xf32, #tpu.memory_space<vmem>>, vector<128x128xf32>
    %cst_11 = arith.constant dense<0.000000e+00> : vector<8x128xf32>
    %13 = tpu.matmul %10, %12, %cst_11 {dimension_numbers = #tpu.dot_dimension_numbers<[1], [0], [0], [1], [0, 0, 1, 1], [], []>} : vector<8x128xf32>, vector<128x128xf32>, vector<8x128xf32> -> vector<8x128xf32>
    %14 = arith.addf %11, %13 : vector<8x128xf32>
    %c0_12 = arith.constant 0 : index
    %c0_13 = arith.constant 0 : index
    %15 = vector.load %arg8[%c0_12, %c0_13] : memref<8x128xf32, #tpu.memory_space<vmem>>, vector<8x128xf32>
    tpu.vector_store %arg8[%c0_12, %c0_13], %14 {strides = array<i32>} : memref<8x128xf32, #tpu.memory_space<vmem>>, vector<8x128xf32>,
    %c0_i32_14 = arith.constant 0 : i32
    %16 = arith.cmpi eq, %arg1, %c0_i32_14 : i32
    %17 = arith.extui %16 : i1 to i32
    %c0_i32_15 = arith.constant 0 : i32
    %18 = arith.cmpi ne, %17, %c0_i32_15 : i32
    scf.if %18 {
      %c0_16 = arith.constant 0 : index
      %c0_17 = arith.constant 0 : index
      %19 = vector.load %arg8[%c0_16, %c0_17] : memref<8x128xf32, #tpu.memory_space<vmem>>, vector<8x128xf32>
      %c0_18 = arith.constant 0 : index
      %c0_19 = arith.constant 0 : index
      %20 = vector.load %arg6[%c0_18, %c0_19] : memref<1x128xf32, #tpu.memory_space<vmem>>, vector<1x128xf32>
      %21 = vector.broadcast %20 : vector<1x128xf32> to vector<8x128xf32>
      %22 = arith.addf %19, %21 : vector<8x128xf32>
      %c0_20 = arith.constant 0 : index
      %c0_21 = arith.constant 0 : index
      %23 = vector.load %arg7[%c0_20, %c0_21] : memref<8x128xf32, #tpu.memory_space<vmem>>, vector<8x128xf32>
      tpu.vector_store %arg7[%c0_20, %c0_21], %22 {strides = array<i32>} : memref<8x128xf32, #tpu.memory_space<vmem>>, vector<8x128xf32>,
    } else {
    }
    return
  }
  func.func @transform_0(%arg0: i32, %arg1: i32) -> (i32, i32) {
    %c0_i32 = arith.constant 0 : i32
    %c0_i32_0 = arith.constant 0 : i32
    return %arg0, %c0_i32 : i32, i32
  }
  func.func @transform_1(%arg0: i32, %arg1: i32) -> (i32, i32) {
    %c0_i32 = arith.constant 0 : i32
    %c0_i32_0 = arith.constant 0 : i32
    return %c0_i32, %arg1 : i32, i32
  }
  func.func @transform_2(%arg0: i32, %arg1: i32) -> (i32, i32) {
    %c0_i32 = arith.constant 0 : i32
    %c0_i32_0 = arith.constant 0 : i32
    return %c0_i32, %arg1 : i32, i32
  }
  func.func @transform_3(%arg0: i32, %arg1: i32) -> (i32, i32) {
    %c0_i32 = arith.constant 0 : i32
    %c0_i32_0 = arith.constant 0 : i32
    return %arg1, %c0_i32 : i32, i32
  }
  func.func @transform_4(%arg0: i32, %arg1: i32) -> (i32, i32) {
    %c0_i32 = arith.constant 0 : i32
    %c0_i32_0 = arith.constant 0 : i32
    %c0_i32_1 = arith.constant 0 : i32
    return %c0_i32, %c0_i32_0 : i32, i32
  }
  func.func @transform_5(%arg0: i32, %arg1: i32) -> (i32, i32) {
    %c0_i32 = arith.constant 0 : i32
    %c0_i32_0 = arith.constant 0 : i32
    return %arg0, %c0_i32 : i32, i32
  }
}

</mosaic_0001>

<llo_original>
// kernel: tpu_custom_call.1
$region0: #{tpu_custom_call.1}
  #allocation0 [shape = 'u32[]', space=smem, size = 0x4, offset = 0x4, fixed_abs, tag = 'smem constant byte address 0x4 - core index']
  #allocation1 [shape = 'u32[144,128]{1,0:T(1,128)}', space=vmem, size = 0x12000, scoped, tag = 'internal scratch']
  #allocation2 [shape = 'f32[8,128]{1,0:T(8,128)}', space=vmem, size = 0x1000, scoped, tag = 'scratch operand']
  %s0 = inlined_call_operand.hbm [shape: f32[8,128], index: 0, kind: input, shape index: {}]
  %s1 = inlined_call_operand.hbm [shape: f32[128,128], index: 1, kind: input, shape index: {}]
  %s2 = inlined_call_operand.vmem [shape: f32[1,128], index: 2, kind: input, shape index: {}]
  %s3 = inlined_call_operand.hbm [shape: f32[128,128], index: 3, kind: input, shape index: {}]
  %s4 = inlined_call_operand.vmem [shape: f32[1,128], index: 4, kind: input, shape index: {}]
  %s5 = inlined_call_operand.hbm [shape: f32[8,128], index: 5, kind: output, shape index: {}]
  %s6 = sld [smem:[#allocation0]]
  $region50: #{tpu_custom_call.1} parent=0
    _
  %s8 = ssub.s32 1, %s6
  %s9 = scalar_select 0, %s8, %s6
  $region1: #{tpu_custom_call.1} parent=0
    #allocation3 [shape = 'u8[4096]{0}', space=vmem, size = 0x1000, scoped, tag = 'input window, operand 0, single buffered']
    #allocation4 [shape = 's32[1]{0}', space=sflag, size = 0x4, scoped, tag = 'scoped memory for tpu_custom_call.1']
    #allocation5 [shape = 's32[1]{0}', space=sflag, size = 0x4, scoped, tag = 'scoped memory for tpu_custom_call.1']
    #allocation6 [shape = 'u8[65536]{0}', space=vmem, size = 0x10000, scoped, tag = 'input window, operand 1, single buffered']
    #allocation7 [shape = 's32[1]{0}', space=sflag, size = 0x4, scoped, tag = 'scoped memory for tpu_custom_call.1']
    #allocation8 [shape = 'u8[65536]{0}', space=vmem, size = 0x10000, scoped, tag = 'input window, operand 3, single buffered']
    #allocation9 [shape = 'u8[4096]{0}', space=vmem, size = 0x1000, scoped, tag = 'output window, operand 0, single buffered']
    %10 = vsyncpa [#allocation4], 0
    %11 = vsyncpa [#allocation7], 0
    %12 = vsyncpa [#allocation5], 0
    // Predicated region
    $region2: #{tpu_custom_call.1} parent=1 // pred_check
      _
    $region3: #{tpu_custom_call.1} parent=1 // pred_check_branch
      %14 = sbr.rel (0) target = $region5
    $region4: #{tpu_custom_call.1} parent=1 // pred_region
      %s16 = ssub.s32 128, 128
      %17 = vsyncadd [#allocation4], %s16
      %s19 = sshll.u32 [#allocation3], 4
      %s20 = int_to_ptr.vmem [resolvable:$true] %s19
      %22 = dma.hbm_to_vmem [thread:$0]  %s0, 128, %s20, [#allocation4]
    $region5: #{tpu_custom_call.1} parent=1 // pred_fallthru
      _
    // Predicated region
    $region6: #{tpu_custom_call.1} parent=1 // pred_check
      _
    $region7: #{tpu_custom_call.1} parent=1 // pred_check_branch
      %24 = sbr.rel (0) target = $region9
    $region8: #{tpu_custom_call.1} parent=1 // pred_region
      %s26 = ssub.s32 2048, 2048
      %27 = vsyncadd [#allocation7], %s26
      %s28 = sshll.u32 [#allocation6], 4
      %s29 = int_to_ptr.vmem [resolvable:$true] %s28
      %34 = dma.hbm_to_vmem [thread:$0]  %s1, 2048, %s29, [#allocation7], 128, 128, 8
    $region9: #{tpu_custom_call.1} parent=1 // pred_fallthru
      _
    // Predicated region
    $region10: #{tpu_custom_call.1} parent=1 // pred_check
      _
    $region11: #{tpu_custom_call.1} parent=1 // pred_check_branch
      %36 = sbr.rel (0) target = $region13
    $region12: #{tpu_custom_call.1} parent=1 // pred_region
      _
    $region13: #{tpu_custom_call.1} parent=1 // pred_fallthru
      _
    // Predicated region
    $region14: #{tpu_custom_call.1} parent=1 // pred_check
      _
    $region15: #{tpu_custom_call.1} parent=1 // pred_check_branch
      %38 = sbr.rel (0) target = $region17
    $region16: #{tpu_custom_call.1} parent=1 // pred_region
      %s40 = ssub.s32 2048, 2048
      %41 = vsyncadd [#allocation7], %s40
      %s42 = sshll.u32 [#allocation8], 4
      %s43 = int_to_ptr.vmem [resolvable:$true] %s42
      %48 = dma.hbm_to_vmem [thread:$0]  %s3, 2048, %s43, [#allocation7], 128, 128, 8
    $region17: #{tpu_custom_call.1} parent=1 // pred_fallthru
      _
    // Predicated region
    $region18: #{tpu_custom_call.1} parent=1 // pred_check
      _
    $region19: #{tpu_custom_call.1} parent=1 // pred_check_branch
      %50 = sbr.rel (0) target = $region21
    $region20: #{tpu_custom_call.1} parent=1 // pred_region
      _
    $region21: #{tpu_custom_call.1} parent=1 // pred_fallthru
      _
    // Predicated region
    $region22: #{tpu_custom_call.1} parent=1 // pred_check
      _
    $region23: #{tpu_custom_call.1} parent=1 // pred_check_branch
      %52 = sbr.rel (0) target = $region25
    $region24: #{tpu_custom_call.1} parent=1 // pred_region
      %53 = dma.done [#allocation4], 128
    $region25: #{tpu_custom_call.1} parent=1 // pred_fallthru
      _
    // Predicated region
    $region26: #{tpu_custom_call.1} parent=1 // pred_check
      _
    $region27: #{tpu_custom_call.1} parent=1 // pred_check_branch
      %55 = sbr.rel (0) target = $region29
    $region28: #{tpu_custom_call.1} parent=1 // pred_region
      %56 = dma.done [#allocation7], 2048
    $region29: #{tpu_custom_call.1} parent=1 // pred_fallthru
      _
    // Predicated region
    $region30: #{tpu_custom_call.1} parent=1 // pred_check
      _
    $region31: #{tpu_custom_call.1} parent=1 // pred_check_branch
      %58 = sbr.rel (0) target = $region33
    $region32: #{tpu_custom_call.1} parent=1 // pred_region
      %59 = dma.done [#allocation7], 2048
    $region33: #{tpu_custom_call.1} parent=1 // pred_fallthru
      _
    %p60 = scmp.eq.s32.totalorder 0, 0
    // Predicated region
    $region34: #{tpu_custom_call.1} parent=1 // pred_check
      %p61 = pneg %p60
    $region35: #{tpu_custom_call.1} parent=1 // pred_check_branch
      %63 = sbr.rel (%p61) target = $region37
    $region36: #{tpu_custom_call.1} parent=1 // pred_region
      %64 = vst [vmem:[#allocation2] sm:$0xff] 0.0
    $region37: #{tpu_custom_call.1} parent=1 // pred_fallthru
      _
    %v65 = vld [vmem:[#allocation3] sm:$0xff]
    %v66 = vld [vmem:[#allocation6] sm:$0xff]
    %v67 = vld [vmem:[#allocation6 + $0x8] sm:$0xff]
    %v68 = vld [vmem:[#allocation6 + $0x10] sm:$0xff]
    %v69 = vld [vmem:[#allocation6 + $0x18] sm:$0xff]
    %v70 = vld [vmem:[#allocation6 + $0x20] sm:$0xff]
    %v71 = vld [vmem:[#allocation6 + $0x28] sm:$0xff]
    %v72 = vld [vmem:[#allocation6 + $0x30] sm:$0xff]
    %v73 = vld [vmem:[#allocation6 + $0x38] sm:$0xff]
    %v74 = vld [vmem:[#allocation6 + $0x40] sm:$0xff]
    %v75 = vld [vmem:[#allocation6 + $0x48] sm:$0xff]
    %v76 = vld [vmem:[#allocation6 + $0x50] sm:$0xff]
    %v77 = vld [vmem:[#allocation6 + $0x58] sm:$0xff]
    %v78 = vld [vmem:[#allocation6 + $0x60] sm:$0xff]
    %v79 = vld [vmem:[#allocation6 + $0x68] sm:$0xff]
    %v80 = vld [vmem:[#allocation6 + $0x70] sm:$0xff]
    %v81 = vld [vmem:[#allocation6 + $0x78] sm:$0xff]
    %v82 = vld [vmem:[%s2] sm:$0x1]
    %v84 = vlaneseq
    %v85 = vshrl.u32 %v84, 7
    %v86 = vsub.s32 0, %v85
    %v87 = vrot.slane %v82, %v86
    %89 = vmatprep.subr.mxu0 0.0
    %90 = vmatpush1.msra.mxu0 %v66
    %91 = vmatprep.subr.mxu0 0.0
    %92 = vmatpush1.msra.mxu0 %v67
    %93 = vmatprep.subr.mxu0 0.0
    %94 = vmatpush1.msra.mxu0 %v68
    %95 = vmatprep.subr.mxu0 0.0
    %96 = vmatpush1.msra.mxu0 %v69
    %97 = vmatprep.subr.mxu0 0.0
    %98 = vmatpush1.msra.mxu0 %v70
    %99 = vmatprep.subr.mxu0 0.0
    %100 = vmatpush1.msra.mxu0 %v71
    %101 = vmatprep.subr.mxu0 0.0
    %102 = vmatpush1.msra.mxu0 %v72
    %103 = vmatprep.subr.mxu0 0.0
    %104 = vmatpush1.msra.mxu0 %v73
    %105 = vmatprep.subr.mxu0 0.0
    %106 = vmatpush1.msra.mxu0 %v74
    %107 = vmatprep.subr.mxu0 0.0
    %108 = vmatpush1.msra.mxu0 %v75
    %109 = vmatprep.subr.mxu0 0.0
    %110 = vmatpush1.msra.mxu0 %v76
    %111 = vmatprep.subr.mxu0 0.0
    %112 = vmatpush1.msra.mxu0 %v77
    %113 = vmatprep.subr.mxu0 0.0
    %114 = vmatpush1.msra.mxu0 %v78
    %115 = vmatprep.subr.mxu0 0.0
    %116 = vmatpush1.msra.mxu0 %v79
    %117 = vmatprep.subr.mxu0 0.0
    %118 = vmatpush1.msra.mxu0 %v80
    %119 = vmatprep.subr.mxu0 0.0
    %120 = vmatpush1.msra.mxu0 %v81
    %121 = vmatprep.subr.mxu0 0.0
    %122 = vmatpush1.msra.mxu0 0.0
    %123 = vmatprep.subr.mxu0 0.0
    %124 = vmatpush1.msra.mxu0 0.0
    %125 = vmatprep.subr.mxu0 0.0
    %126 = vmatpush1.msra.mxu0 0.0
    %127 = vmatprep.subr.mxu0 0.0
    %128 = vmatpush1.msra.mxu0 0.0
    %129 = vmatprep.subr.mxu0 0.0
    %130 = vmatpush1.msra.mxu0 0.0
    %131 = vmatprep.subr.mxu0 0.0
    %132 = vmatpush1.msra.mxu0 0.0
    %133 = vmatprep.subr.mxu0 0.0
    %134 = vmatpush1.msra.mxu0 0.0
    %135 = vmatprep.subr.mxu0 0.0
    %136 = vmatpush1.msra.mxu0 0.0
    %137 = vmatprep.subr.mxu0 0.0
    %138 = vmatpush1.msra.mxu0 0.0
    %139 = vmatprep.subr.mxu0 0.0
    %140 = vmatpush1.msra.mxu0 0.0
    %141 = vmatprep.subr.mxu0 0.0
    %142 = vmatpush1.msra.mxu0 0.0
    %143 = vmatprep.subr.mxu0 0.0
    %144 = vmatpush1.msra.mxu0 0.0
    %145 = vmatprep.subr.mxu0 0.0
    %146 = vmatpush1.msra.mxu0 0.0
    %147 = vmatprep.subr.mxu0 0.0
    %148 = vmatpush1.msra.mxu0 0.0
    %149 = vmatprep.subr.mxu0 0.0
    %150 = vmatpush1.msra.mxu0 0.0
    %151 = vmatprep.subr.mxu0 0.0
    %152 = vmatpush1.msra.mxu0 0.0
    %153 = vmatprep.mubr.f32.mxu0 0.0
    %154 = vmatmul.mubr.f32.gmra.mrb[0].mxu0 %v65
    %v155 = vpop.f32.mrb[0].mxu0
    %v156 = vadd.f32 %v87, %v155
    %v157 = vpop.f32.mrb[0].mxu0
    %158 = vdwg.mxu0
    %v159 = vmax.f32 %v156, 0.0
    %v160 = vld [vmem:[#allocation2] sm:$0xff]
    %v161 = vld [vmem:[#allocation8] sm:$0xff]
    %v162 = vld [vmem:[#allocation8 + $0x8] sm:$0xff]
    %v163 = vld [vmem:[#allocation8 + $0x10] sm:$0xff]
    %v164 = vld [vmem:[#allocation8 + $0x18] sm:$0xff]
    %v165 = vld [vmem:[#allocation8 + $0x20] sm:$0xff]
    %v166 = vld [vmem:[#allocation8 + $0x28] sm:$0xff]
    %v167 = vld [vmem:[#allocation8 + $0x30] sm:$0xff]
    %v168 = vld [vmem:[#allocation8 + $0x38] sm:$0xff]
    %v169 = vld [vmem:[#allocation8 + $0x40] sm:$0xff]
    %v170 = vld [vmem:[#allocation8 + $0x48] sm:$0xff]
    %v171 = vld [vmem:[#allocation8 + $0x50] sm:$0xff]
    %v172 = vld [vmem:[#allocation8 + $0x58] sm:$0xff]
    %v173 = vld [vmem:[#allocation8 + $0x60] sm:$0xff]
    %v174 = vld [vmem:[#allocation8 + $0x68] sm:$0xff]
    %v175 = vld [vmem:[#allocation8 + $0x70] sm:$0xff]
    %v176 = vld [vmem:[#allocation8 + $0x78] sm:$0xff]
    %177 = vmatprep.subr.mxu0 0.0
    %178 = vmatpush1.msra.mxu0 %v161
    %179 = vmatprep.subr.mxu0 0.0
    %180 = vmatpush1.msra.mxu0 %v162
    %181 = vmatprep.subr.mxu0 0.0
    %182 = vmatpush1.msra.mxu0 %v163
    %183 = vmatprep.subr.mxu0 0.0
    %184 = vmatpush1.msra.mxu0 %v164
    %185 = vmatprep.subr.mxu0 0.0
    %186 = vmatpush1.msra.mxu0 %v165
    %187 = vmatprep.subr.mxu0 0.0
    %188 = vmatpush1.msra.mxu0 %v166
    %189 = vmatprep.subr.mxu0 0.0
    %190 = vmatpush1.msra.mxu0 %v167
    %191 = vmatprep.subr.mxu0 0.0
    %192 = vmatpush1.msra.mxu0 %v168
    %193 = vmatprep.subr.mxu0 0.0
    %194 = vmatpush1.msra.mxu0 %v169
    %195 = vmatprep.subr.mxu0 0.0
    %196 = vmatpush1.msra.mxu0 %v170
    %197 = vmatprep.subr.mxu0 0.0
    %198 = vmatpush1.msra.mxu0 %v171
    %199 = vmatprep.subr.mxu0 0.0
    %200 = vmatpush1.msra.mxu0 %v172
    %201 = vmatprep.subr.mxu0 0.0
    %202 = vmatpush1.msra.mxu0 %v173
    %203 = vmatprep.subr.mxu0 0.0
    %204 = vmatpush1.msra.mxu0 %v174
    %205 = vmatprep.subr.mxu0 0.0
    %206 = vmatpush1.msra.mxu0 %v175
    %207 = vmatprep.subr.mxu0 0.0
    %208 = vmatpush1.msra.mxu0 %v176
    %209 = vmatprep.subr.mxu0 0.0
    %210 = vmatpush1.msra.mxu0 0.0
    %211 = vmatprep.subr.mxu0 0.0
    %212 = vmatpush1.msra.mxu0 0.0
    %213 = vmatprep.subr.mxu0 0.0
    %214 = vmatpush1.msra.mxu0 0.0
    %215 = vmatprep.subr.mxu0 0.0
    %216 = vmatpush1.msra.mxu0 0.0
    %217 = vmatprep.subr.mxu0 0.0
    %218 = vmatpush1.msra.mxu0 0.0
    %219 = vmatprep.subr.mxu0 0.0
    %220 = vmatpush1.msra.mxu0 0.0
    %221 = vmatprep.subr.mxu0 0.0
    %222 = vmatpush1.msra.mxu0 0.0
    %223 = vmatprep.subr.mxu0 0.0
    %224 = vmatpush1.msra.mxu0 0.0
    %225 = vmatprep.subr.mxu0 0.0
    %226 = vmatpush1.msra.mxu0 0.0
    %227 = vmatprep.subr.mxu0 0.0
    %228 = vmatpush1.msra.mxu0 0.0
    %229 = vmatprep.subr.mxu0 0.0
    %230 = vmatpush1.msra.mxu0 0.0
    %231 = vmatprep.subr.mxu0 0.0
    %232 = vmatpush1.msra.mxu0 0.0
    %233 = vmatprep.subr.mxu0 0.0
    %234 = vmatpush1.msra.mxu0 0.0
    %235 = vmatprep.subr.mxu0 0.0
    %236 = vmatpush1.msra.mxu0 0.0
    %237 = vmatprep.subr.mxu0 0.0
    %238 = vmatpush1.msra.mxu0 0.0
    %239 = vmatprep.subr.mxu0 0.0
    %240 = vmatpush1.msra.mxu0 0.0
    %241 = vmatprep.mubr.f32.mxu0 0.0
    %242 = vmatmul.mubr.f32.gmra.mrb[0].mxu0 %v159
    %v243 = vpop.f32.mrb[0].mxu0
    %v244 = vadd.f32 0.0, %v243
    %v245 = vpop.f32.mrb[0].mxu0
    %246 = vdwg.mxu0
    %v247 = vadd.f32 %v160, %v244
    %248 = vst [vmem:[#allocation2] sm:$0xff] %v247
    // Predicated region
    $region38: #{tpu_custom_call.1} parent=1 // pred_check
      %p249 = pneg %p60
    $region39: #{tpu_custom_call.1} parent=1 // pred_check_branch
      %251 = sbr.rel (%p249) target = $region41
    $region40: #{tpu_custom_call.1} parent=1 // pred_region
      %v252 = vld [vmem:[#allocation2] sm:$0xff]
      %v253 = vld [vmem:[%s4] sm:$0x1]
      %v255 = vlaneseq
      %v256 = vshrl.u32 %v255, 7
      %v257 = vsub.s32 0, %v256
      %v258 = vrot.slane %v253, %v257
      %v260 = vadd.f32 %v252, %v258
      %261 = vst [vmem:[#allocation9] sm:$0xff] %v260
    $region41: #{tpu_custom_call.1} parent=1 // pred_fallthru
      _
    // Predicated region
    $region42: #{tpu_custom_call.1} parent=1 // pred_check
      _
    $region43: #{tpu_custom_call.1} parent=1 // pred_check_branch
      %263 = sbr.rel (0) target = $region45
    $region44: #{tpu_custom_call.1} parent=1 // pred_region
      %s265 = ssub.s32 128, 128
      %266 = vsyncadd [#allocation5], %s265
      %s268 = sshll.u32 [#allocation9], 4
      %s269 = int_to_ptr.vmem [resolvable:$true] %s268
      %271 = dma.vmem_to_hbm [thread:$0]  %s269, 128, %s5, [#allocation5]
    $region45: #{tpu_custom_call.1} parent=1 // pred_fallthru
      _
    // Predicated region
    $region46: #{tpu_custom_call.1} parent=1 // pred_check
      _
    $region47: #{tpu_custom_call.1} parent=1 // pred_check_branch
      %273 = sbr.rel (0) target = $region49
    $region48: #{tpu_custom_call.1} parent=1 // pred_region
      %274 = dma.done [#allocation5], 128
    $region49: #{tpu_custom_call.1} parent=1 // pred_fallthru
      _
    %275 = vsyncpa [#allocation4], 1
    %276 = vsyncpa [#allocation7], 1
    %277 = vsyncpa [#allocation5], 1

// kernel: tpu_custom_call.1
$region0: #{tpu_custom_call.1}
  #allocation0 [shape = 'u32[]', space=smem, size = 0x4, offset = 0x4, fixed_abs, tag = 'smem constant byte address 0x4 - core index']
  #allocation1 [shape = 'u32[144,128]{1,0:T(1,128)}', space=vmem, size = 0x12000, scoped, tag = 'internal scratch']
  #allocation2 [shape = 'f32[8,128]{1,0:T(8,128)}', space=vmem, size = 0x1000, scoped, tag = 'scratch operand']
  %s0 = inlined_call_operand.hbm [shape: f32[8,128], index: 0, kind: input, shape index: {}]
  %s1 = inlined_call_operand.hbm [shape: f32[128,128], index: 1, kind: input, shape index: {}]
  %s2 = inlined_call_operand.vmem [shape: f32[1,128], index: 2, kind: input, shape index: {}]
  %s3 = inlined_call_operand.hbm [shape: f32[128,128], index: 3, kind: input, shape index: {}]
  %s4 = inlined_call_operand.vmem [shape: f32[1,128], index: 4, kind: input, shape index: {}]
  %s5 = inlined_call_operand.hbm [shape: f32[8,128], index: 5, kind: output, shape index: {}]
  %s6 = sld [smem:[#allocation0]]
  $region50: #{tpu_custom_call.1} parent=0
    _
  %s8 = ssub.s32 1, %s6
  %s9 = scalar_select 0, %s8, %s6
  $region1: #{tpu_custom_call.1} parent=0
    #allocation3 [shape = 'u8[4096]{0}', space=vmem, size = 0x1000, scoped, tag = 'input window, operand 0, single buffered']
    #allocation4 [shape = 's32[1]{0}', space=sflag, size = 0x4, scoped, tag = 'scoped memory for tpu_custom_call.1']
    #allocation5 [shape = 's32[1]{0}', space=sflag, size = 0x4, scoped, tag = 'scoped memory for tpu_custom_call.1']
    #allocation6 [shape = 'u8[65536]{0}', space=vmem, size = 0x10000, scoped, tag = 'input window, operand 1, single buffered']
    #allocation7 [shape = 's32[1]{0}', space=sflag, size = 0x4, scoped, tag = 'scoped memory for tpu_custom_call.1']
    #allocation8 [shape = 'u8[65536]{0}', space=vmem, size = 0x10000, scoped, tag = 'input window, operand 3, single buffered']
    #allocation9 [shape = 'u8[4096]{0}', space=vmem, size = 0x1000, scoped, tag = 'output window, operand 0, single buffered']
    %10 = vsyncpa [#allocation4], 0
    %11 = vsyncpa [#allocation7], 0
    %12 = vsyncpa [#allocation5], 0
    // Predicated region
    $region2: #{tpu_custom_call.1} parent=1 // pred_check
      _
    $region3: #{tpu_custom_call.1} parent=1 // pred_check_branch
      %14 = sbr.rel (0) target = $region5
    $region4: #{tpu_custom_call.1} parent=1 // pred_region
      %s16 = ssub.s32 128, 128
      %17 = vsyncadd [#allocation4], %s16
      %s19 = sshll.u32 [#allocation3], 4
      %s20 = int_to_ptr.vmem [resolvable:$true] %s19
      %22 = dma.hbm_to_vmem [thread:$0]  %s0, 128, %s20, [#allocation4]
    $region5: #{tpu_custom_call.1} parent=1 // pred_fallthru
      _
    // Predicated region
    $region6: #{tpu_custom_call.1} parent=1 // pred_check
      _
    $region7: #{tpu_custom_call.1} parent=1 // pred_check_branch
      %24 = sbr.rel (0) target = $region9
    $region8: #{tpu_custom_call.1} parent=1 // pred_region
      %s26 = ssub.s32 2048, 2048
      %27 = vsyncadd [#allocation7], %s26
      %s28 = sshll.u32 [#allocation6], 4
      %s29 = int_to_ptr.vmem [resolvable:$true] %s28
      %34 = dma.hbm_to_vmem [thread:$0]  %s1, 2048, %s29, [#allocation7], 128, 128, 8
    $region9: #{tpu_custom_call.1} parent=1 // pred_fallthru
      _
    // Predicated region
    $region10: #{tpu_custom_call.1} parent=1 // pred_check
      _
    $region11: #{tpu_custom_call.1} parent=1 // pred_check_branch
      %36 = sbr.rel (0) target = $region13
    $region12: #{tpu_custom_call.1} parent=1 // pred_region
      _
    $region13: #{tpu_custom_call.1} parent=1 // pred_fallthru
      _
    // Predicated region
    $region14: #{tpu_custom_call.1} parent=1 // pred_check
      _
    $region15: #{tpu_custom_call.1} parent=1 // pred_check_branch
      %38 = sbr.rel (0) target = $region17
    $region16: #{tpu_custom_call.1} parent=1 // pred_region
      %s40 = ssub.s32 2048, 2048
      %41 = vsyncadd [#allocation7], %s40
      %s42 = sshll.u32 [#allocation8], 4
      %s43 = int_to_ptr.vmem [resolvable:$true] %s42
      %48 = dma.hbm_to_vmem [thread:$0]  %s3, 2048, %s43, [#allocation7], 128, 128, 8
    $region17: #{tpu_custom_call.1} parent=1 // pred_fallthru
      _
    // Predicated region
    $region18: #{tpu_custom_call.1} parent=1 // pred_check
      _
    $region19: #{tpu_custom_call.1} parent=1 // pred_check_branch
      %50 = sbr.rel (0) target = $region21
    $region20: #{tpu_custom_call.1} parent=1 // pred_region
      _
    $region21: #{tpu_custom_call.1} parent=1 // pred_fallthru
      _
    // Predicated region
    $region22: #{tpu_custom_call.1} parent=1 // pred_check
      _
    $region23: #{tpu_custom_call.1} parent=1 // pred_check_branch
      %52 = sbr.rel (0) target = $region25
    $region24: #{tpu_custom_call.1} parent=1 // pred_region
      %53 = dma.done [#allocation4], 128
    $region25: #{tpu_custom_call.1} parent=1 // pred_fallthru
      _
    // Predicated region
    $region26: #{tpu_custom_call.1} parent=1 // pred_check
      _
    $region27: #{tpu_custom_call.1} parent=1 // pred_check_branch
      %55 = sbr.rel (0) target = $region29
    $region28: #{tpu_custom_call.1} parent=1 // pred_region
      %56 = dma.done [#allocation7], 2048
    $region29: #{tpu_custom_call.1} parent=1 // pred_fallthru
      _
    // Predicated region
    $region30: #{tpu_custom_call.1} parent=1 // pred_check
      _
    $region31: #{tpu_custom_call.1} parent=1 // pred_check_branch
      %58 = sbr.rel (0) target = $region33
    $region32: #{tpu_custom_call.1} parent=1 // pred_region
      %59 = dma.done [#allocation7], 2048
    $region33: #{tpu_custom_call.1} parent=1 // pred_fallthru
      _
    %p60 = scmp.eq.s32.totalorder 0, 0
    // Predicated region
    $region34: #{tpu_custom_call.1} parent=1 // pred_check
      %p61 = pneg %p60
    $region35: #{tpu_custom_call.1} parent=1 // pred_check_branch
      %63 = sbr.rel (%p61) target = $region37
    $region36: #{tpu_custom_call.1} parent=1 // pred_region
      %64 = vst [vmem:[#allocation2] sm:$0xff] 0.0
    $region37: #{tpu_custom_call.1} parent=1 // pred_fallthru
      _
    %v65 = vld [vmem:[#allocation3] sm:$0xff]
    %v66 = vld [vmem:[#allocation6] sm:$0xff]
    %v67 = vld [vmem:[#allocation6 + $0x8] sm:$0xff]
    %v68 = vld [vmem:[#allocation6 + $0x10] sm:$0xff]
    %v69 = vld [vmem:[#allocation6 + $0x18] sm:$0xff]
    %v70 = vld [vmem:[#allocation6 + $0x20] sm:$0xff]
    %v71 = vld [vmem:[#allocation6 + $0x28] sm:$0xff]
    %v72 = vld [vmem:[#allocation6 + $0x30] sm:$0xff]
    %v73 = vld [vmem:[#allocation6 + $0x38] sm:$0xff]
    %v74 = vld [vmem:[#allocation6 + $0x40] sm:$0xff]
    %v75 = vld [vmem:[#allocation6 + $0x48] sm:$0xff]
    %v76 = vld [vmem:[#allocation6 + $0x50] sm:$0xff]
    %v77 = vld [vmem:[#allocation6 + $0x58] sm:$0xff]
    %v78 = vld [vmem:[#allocation6 + $0x60] sm:$0xff]
    %v79 = vld [vmem:[#allocation6 + $0x68] sm:$0xff]
    %v80 = vld [vmem:[#allocation6 + $0x70] sm:$0xff]
    %v81 = vld [vmem:[#allocation6 + $0x78] sm:$0xff]
    %v82 = vld [vmem:[%s2] sm:$0x1]
    %v84 = vlaneseq
    %v85 = vshrl.u32 %v84, 7
    %v86 = vsub.s32 0, %v85
    %v87 = vrot.slane %v82, %v86
    %89 = vmatprep.subr.mxu0 0.0
    %90 = vmatpush1.msra.mxu0 %v66
    %91 = vmatprep.subr.mxu0 0.0
    %92 = vmatpush1.msra.mxu0 %v67
    %93 = vmatprep.subr.mxu0 0.0
    %94 = vmatpush1.msra.mxu0 %v68
    %95 = vmatprep.subr.mxu0 0.0
    %96 = vmatpush1.msra.mxu0 %v69
    %97 = vmatprep.subr.mxu0 0.0
    %98 = vmatpush1.msra.mxu0 %v70
    %99 = vmatprep.subr.mxu0 0.0
    %100 = vmatpush1.msra.mxu0 %v71
    %101 = vmatprep.subr.mxu0 0.0
    %102 = vmatpush1.msra.mxu0 %v72
    %103 = vmatprep.subr.mxu0 0.0
    %104 = vmatpush1.msra.mxu0 %v73
    %105 = vmatprep.subr.mxu0 0.0
    %106 = vmatpush1.msra.mxu0 %v74
    %107 = vmatprep.subr.mxu0 0.0
    %108 = vmatpush1.msra.mxu0 %v75
    %109 = vmatprep.subr.mxu0 0.0
    %110 = vmatpush1.msra.mxu0 %v76
    %111 = vmatprep.subr.mxu0 0.0
    %112 = vmatpush1.msra.mxu0 %v77
    %113 = vmatprep.subr.mxu0 0.0
    %114 = vmatpush1.msra.mxu0 %v78
    %115 = vmatprep.subr.mxu0 0.0
    %116 = vmatpush1.msra.mxu0 %v79
    %117 = vmatprep.subr.mxu0 0.0
    %118 = vmatpush1.msra.mxu0 %v80
    %119 = vmatprep.subr.mxu0 0.0
    %120 = vmatpush1.msra.mxu0 %v81
    %121 = vmatprep.subr.mxu0 0.0
    %122 = vmatpush1.msra.mxu0 0.0
    %123 = vmatprep.subr.mxu0 0.0
    %124 = vmatpush1.msra.mxu0 0.0
    %125 = vmatprep.subr.mxu0 0.0
    %126 = vmatpush1.msra.mxu0 0.0
    %127 = vmatprep.subr.mxu0 0.0
    %128 = vmatpush1.msra.mxu0 0.0
    %129 = vmatprep.subr.mxu0 0.0
    %130 = vmatpush1.msra.mxu0 0.0
    %131 = vmatprep.subr.mxu0 0.0
    %132 = vmatpush1.msra.mxu0 0.0
    %133 = vmatprep.subr.mxu0 0.0
    %134 = vmatpush1.msra.mxu0 0.0
    %135 = vmatprep.subr.mxu0 0.0
    %136 = vmatpush1.msra.mxu0 0.0
    %137 = vmatprep.subr.mxu0 0.0
    %138 = vmatpush1.msra.mxu0 0.0
    %139 = vmatprep.subr.mxu0 0.0
    %140 = vmatpush1.msra.mxu0 0.0
    %141 = vmatprep.subr.mxu0 0.0
    %142 = vmatpush1.msra.mxu0 0.0
    %143 = vmatprep.subr.mxu0 0.0
    %144 = vmatpush1.msra.mxu0 0.0
    %145 = vmatprep.subr.mxu0 0.0
    %146 = vmatpush1.msra.mxu0 0.0
    %147 = vmatprep.subr.mxu0 0.0
    %148 = vmatpush1.msra.mxu0 0.0
    %149 = vmatprep.subr.mxu0 0.0
    %150 = vmatpush1.msra.mxu0 0.0
    %151 = vmatprep.subr.mxu0 0.0
    %152 = vmatpush1.msra.mxu0 0.0
    %153 = vmatprep.mubr.f32.mxu0 0.0
    %154 = vmatmul.mubr.f32.gmra.mrb[0].mxu0 %v65
    %v155 = vpop.f32.mrb[0].mxu0
    %v156 = vadd.f32 %v87, %v155
    %v157 = vpop.f32.mrb[0].mxu0
    %158 = vdwg.mxu0
    %v159 = vmax.f32 %v156, 0.0
    %v160 = vld [vmem:[#allocation2] sm:$0xff]
    %v161 = vld [vmem:[#allocation8] sm:$0xff]
    %v162 = vld [vmem:[#allocation8 + $0x8] sm:$0xff]
    %v163 = vld [vmem:[#allocation8 + $0x10] sm:$0xff]
    %v164 = vld [vmem:[#allocation8 + $0x18] sm:$0xff]
    %v165 = vld [vmem:[#allocation8 + $0x20] sm:$0xff]
    %v166 = vld [vmem:[#allocation8 + $0x28] sm:$0xff]
    %v167 = vld [vmem:[#allocation8 + $0x30] sm:$0xff]
    %v168 = vld [vmem:[#allocation8 + $0x38] sm:$0xff]
    %v169 = vld [vmem:[#allocation8 + $0x40] sm:$0xff]
    %v170 = vld [vmem:[#allocation8 + $0x48] sm:$0xff]
    %v171 = vld [vmem:[#allocation8 + $0x50] sm:$0xff]
    %v172 = vld [vmem:[#allocation8 + $0x58] sm:$0xff]
    %v173 = vld [vmem:[#allocation8 + $0x60] sm:$0xff]
    %v174 = vld [vmem:[#allocation8 + $0x68] sm:$0xff]
    %v175 = vld [vmem:[#allocation8 + $0x70] sm:$0xff]
    %v176 = vld [vmem:[#allocation8 + $0x78] sm:$0xff]
    %177 = vmatprep.subr.mxu0 0.0
    %178 = vmatpush1.msra.mxu0 %v161
    %179 = vmatprep.subr.mxu0 0.0
    %180 = vmatpush1.msra.mxu0 %v162
    %181 = vmatprep.subr.mxu0 0.0
    %182 = vmatpush1.msra.mxu0 %v163
    %183 = vmatprep.subr.mxu0 0.0
    %184 = vmatpush1.msra.mxu0 %v164
    %185 = vmatprep.subr.mxu0 0.0
    %186 = vmatpush1.msra.mxu0 %v165
    %187 = vmatprep.subr.mxu0 0.0
    %188 = vmatpush1.msra.mxu0 %v166
    %189 = vmatprep.subr.mxu0 0.0
    %190 = vmatpush1.msra.mxu0 %v167
    %191 = vmatprep.subr.mxu0 0.0
    %192 = vmatpush1.msra.mxu0 %v168
    %193 = vmatprep.subr.mxu0 0.0
    %194 = vmatpush1.msra.mxu0 %v169
    %195 = vmatprep.subr.mxu0 0.0
    %196 = vmatpush1.msra.mxu0 %v170
    %197 = vmatprep.subr.mxu0 0.0
    %198 = vmatpush1.msra.mxu0 %v171
    %199 = vmatprep.subr.mxu0 0.0
    %200 = vmatpush1.msra.mxu0 %v172
    %201 = vmatprep.subr.mxu0 0.0
    %202 = vmatpush1.msra.mxu0 %v173
    %203 = vmatprep.subr.mxu0 0.0
    %204 = vmatpush1.msra.mxu0 %v174
    %205 = vmatprep.subr.mxu0 0.0
    %206 = vmatpush1.msra.mxu0 %v175
    %207 = vmatprep.subr.mxu0 0.0
    %208 = vmatpush1.msra.mxu0 %v176
    %209 = vmatprep.subr.mxu0 0.0
    %210 = vmatpush1.msra.mxu0 0.0
    %211 = vmatprep.subr.mxu0 0.0
    %212 = vmatpush1.msra.mxu0 0.0
    %213 = vmatprep.subr.mxu0 0.0
    %214 = vmatpush1.msra.mxu0 0.0
    %215 = vmatprep.subr.mxu0 0.0
    %216 = vmatpush1.msra.mxu0 0.0
    %217 = vmatprep.subr.mxu0 0.0
    %218 = vmatpush1.msra.mxu0 0.0
    %219 = vmatprep.subr.mxu0 0.0
    %220 = vmatpush1.msra.mxu0 0.0
    %221 = vmatprep.subr.mxu0 0.0
    %222 = vmatpush1.msra.mxu0 0.0
    %223 = vmatprep.subr.mxu0 0.0
    %224 = vmatpush1.msra.mxu0 0.0
    %225 = vmatprep.subr.mxu0 0.0
    %226 = vmatpush1.msra.mxu0 0.0
    %227 = vmatprep.subr.mxu0 0.0
    %228 = vmatpush1.msra.mxu0 0.0
    %229 = vmatprep.subr.mxu0 0.0
    %230 = vmatpush1.msra.mxu0 0.0
    %231 = vmatprep.subr.mxu0 0.0
    %232 = vmatpush1.msra.mxu0 0.0
    %233 = vmatprep.subr.mxu0 0.0
    %234 = vmatpush1.msra.mxu0 0.0
    %235 = vmatprep.subr.mxu0 0.0
    %236 = vmatpush1.msra.mxu0 0.0
    %237 = vmatprep.subr.mxu0 0.0
    %238 = vmatpush1.msra.mxu0 0.0
    %239 = vmatprep.subr.mxu0 0.0
    %240 = vmatpush1.msra.mxu0 0.0
    %241 = vmatprep.mubr.f32.mxu0 0.0
    %242 = vmatmul.mubr.f32.gmra.mrb[0].mxu0 %v159
    %v243 = vpop.f32.mrb[0].mxu0
    %v244 = vadd.f32 0.0, %v243
    %v245 = vpop.f32.mrb[0].mxu0
    %246 = vdwg.mxu0
    %v247 = vadd.f32 %v160, %v244
    %248 = vst [vmem:[#allocation2] sm:$0xff] %v247
    // Predicated region
    $region38: #{tpu_custom_call.1} parent=1 // pred_check
      %p249 = pneg %p60
    $region39: #{tpu_custom_call.1} parent=1 // pred_check_branch
      %251 = sbr.rel (%p249) target = $region41
    $region40: #{tpu_custom_call.1} parent=1 // pred_region
      %v252 = vld [vmem:[#allocation2] sm:$0xff]
      %v253 = vld [vmem:[%s4] sm:$0x1]
      %v255 = vlaneseq
      %v256 = vshrl.u32 %v255, 7
      %v257 = vsub.s32 0, %v256
      %v258 = vrot.slane %v253, %v257
      %v260 = vadd.f32 %v252, %v258
      %261 = vst [vmem:[#allocation9] sm:$0xff] %v260
    $region41: #{tpu_custom_call.1} parent=1 // pred_fallthru
      _
    // Predicated region
    $region42: #{tpu_custom_call.1} parent=1 // pred_check
      _
    $region43: #{tpu_custom_call.1} parent=1 // pred_check_branch
      %263 = sbr.rel (0) target = $region45
    $region44: #{tpu_custom_call.1} parent=1 // pred_region
      %s265 = ssub.s32 128, 128
      %266 = vsyncadd [#allocation5], %s265
      %s268 = sshll.u32 [#allocation9], 4
      %s269 = int_to_ptr.vmem [resolvable:$true] %s268
      %271 = dma.vmem_to_hbm [thread:$0]  %s269, 128, %s5, [#allocation5]
    $region45: #{tpu_custom_call.1} parent=1 // pred_fallthru
      _
    // Predicated region
    $region46: #{tpu_custom_call.1} parent=1 // pred_check
      _
    $region47: #{tpu_custom_call.1} parent=1 // pred_check_branch
      %273 = sbr.rel (0) target = $region49
    $region48: #{tpu_custom_call.1} parent=1 // pred_region
      %274 = dma.done [#allocation5], 128
    $region49: #{tpu_custom_call.1} parent=1 // pred_fallthru
      _
    %275 = vsyncpa [#allocation4], 1
    %276 = vsyncpa [#allocation7], 1
    %277 = vsyncpa [#allocation5], 1

</llo_original>
